<compile_context>
chip_gen: v7x
topology: tpu7x:2x2x1
jax: 0.10.0
libtpu: 0.0.40
codegen_flags: <defaults>
</compile_context>

<pallas_src>
import functools
import math

import jax
import jax.numpy as jnp
from jax import lax
from jax.experimental import pallas as pl
from jax.experimental.pallas import tpu as pltpu


def actor_critic_kernel(x_ref, w1_ref, b1_ref, w2_ref, b2_ref, w3_ref, b3_ref,
                        out_ref, *, action_dim):
    x = x_ref[...]

    # Layer 1 (actor || critic packed on lanes): [TB, obs] @ [obs, 2H] -> [TB, 2H]
    h = jnp.dot(x, w1_ref[...], preferred_element_type=jnp.float32) + b1_ref[...]
    h = jnp.maximum(h, 0.0)

    # Layer 2 (block-diagonal): [TB, 2H] @ [2H, 2H] -> [TB, 2H]
    h = jnp.dot(h, w2_ref[...], preferred_element_type=jnp.float32) + b2_ref[...]
    h = jnp.maximum(h, 0.0)

    # Layer 3 (block-diagonal, lane-padded): [TB, 2H] @ [2H, OUT_PAD] -> [TB, OUT_PAD]
    # cols [0, A)       = actor logits
    # col  A            = critic value
    # cols (A, OUT_PAD) = exact zeros (zero weights, zero bias)
    raw = jnp.dot(h, w3_ref[...], preferred_element_type=jnp.float32) + b3_ref[...]

    col = lax.broadcasted_iota(jnp.int32, raw.shape, 1)
    logits = jnp.where(col < action_dim, raw, -jnp.inf)   # mask padded lanes
    m = jnp.max(logits, axis=-1, keepdims=True)
    e = jnp.exp(logits - m)                                # padded lanes -> 0
    denom = jnp.sum(e, axis=-1, keepdims=True)
    probs = e * pl.reciprocal(denom, approx=False)         # exact: keeps 1e-5 sum-to-1

    # probs in [0, A); raw (= value at col A, zeros beyond) elsewhere.
    out_ref[...] = jnp.where(col < action_dim, probs, raw).astype(out_ref.dtype)


def pack_params(p):
    """Pack actor+critic weights into 3 lane-dense matrices.

    Call ONCE at init time and reuse the returned bundle for every forward
    call: the concats and block-diagonal .at[].set fills launch several XLA
    ops + HBM round-trips that would otherwise dominate this tiny kernel.
    """
    obs_dim, hidden = p["wa1"].shape
    action_dim = int(p["wa3"].shape[1])
    h2 = 2 * hidden
    out_pad = max(128, 128 * math.ceil((action_dim + 1) / 128))

    w1 = jnp.concatenate([p["wa1"], p["wc1"]], axis=1)                # [obs, 2H]
    b1 = jnp.concatenate([p["ba1"], p["bc1"]], axis=1)                # [1, 2H]

    w2 = jnp.zeros((h2, h2), jnp.float32)
    w2 = w2.at[:hidden, :hidden].set(p["wa2"]).at[hidden:, hidden:].set(p["wc2"])
    b2 = jnp.concatenate([p["ba2"], p["bc2"]], axis=1)                # [1, 2H]

    w3 = jnp.zeros((h2, out_pad), jnp.float32)
    w3 = w3.at[:hidden, :action_dim].set(p["wa3"])
    w3 = w3.at[hidden:, action_dim:action_dim + 1].set(p["wc3"])
    b3 = jnp.zeros((1, out_pad), jnp.float32)
    b3 = b3.at[:, :action_dim].set(p["ba3"])
    b3 = b3.at[:, action_dim:action_dim + 1].set(p["bc3"])

    return dict(w1=w1, b1=b1, w2=w2, b2=b2, w3=w3, b3=b3,
                obs_dim=int(obs_dim), hidden=int(hidden), action_dim=action_dim)


def _default_batch_tile(B):
    # One grid step for small/medium batches (per-step overhead ~0.35us dwarfs
    # the per-step MXU time); for big batches the largest divisor of B in
    # [256, 2048] so M fills the 256-row MXU on v6e/v7x (v5e 128x128 is full
    # at M>=128 anyway).
    if B <= 2048:
        return B
    for t in (2048, 1024, 512, 256):
        if B % t == 0:
            return t
    return B  # awkward B: take one big step rather than masked partial tiles


def actor_critic_forward(x, packed, *, batch_tile=None, core_parallel=False):
    """x: [B, obs_dim] f32.  packed: output of pack_params() (computed once)."""
    B, obs_dim = x.shape
    action_dim = packed["action_dim"]
    hidden = packed["hidden"]
    w1, b1, w2, b2, w3, b3 = (packed[k] for k in ("w1", "b1", "w2", "b2", "w3", "b3"))
    h2 = w1.shape[1]
    out_pad = w3.shape[1]

    if batch_tile is None:
        batch_tile = _default_batch_tile(B)
    assert B % batch_tile == 0 and (batch_tile % 8 == 0 or batch_tile == B)
    num_steps = B // batch_tile
    grid = (num_steps,)

    kernel = functools.partial(actor_critic_kernel, action_dim=action_dim)

    # Useful FLOPs only (actor + critic), excluding the zero-padded block-diag.
    flops = 2 * B * (2 * obs_dim * hidden + 2 * hidden * hidden
                     + hidden * action_dim + hidden * 1)
    weight_bytes = 4 * (obs_dim * h2 + h2 + h2 * h2 + h2 + h2 * out_pad + out_pad)
    bytes_accessed = 4 * (B * obs_dim + B * out_pad) + weight_bytes

    # Weights/biases: constant index_map -> DMA'd once, VMEM-resident across all
    # batch tiles.  With >1 grid step single-buffer them (double buffers buy
    # nothing for never-refetched blocks); with 1 step buffering is moot.
    if num_steps > 1:
        def w_spec(shape):
            return pl.BlockSpec(shape, lambda i: (0, 0), pipeline_mode=pl.Buffered(1))
    else:
        def w_spec(shape):
            return pl.BlockSpec(shape, lambda i: (0, 0))

    # Batch-axis semantics: nothing to shard for a single step; with many steps
    # on v7x, CORE_PARALLEL is what actually splits tiles across the two
    # TensorCores (the plain "parallel" string is a near-no-op for codegen).
    if num_steps == 1:
        dim_sem = ("arbitrary",)
    elif core_parallel:
        dim_sem = (pltpu.CORE_PARALLEL,)
    else:
        dim_sem = ("parallel",)

    # Scoped-VMEM: double-buffered x/out tiles + weights.  Only raise the limit
    # when approaching v5e's 16 MiB default (tiles >~4096 rows).
    vmem_est = (2 * 4 * batch_tile * (obs_dim + out_pad)
                + (1 if num_steps > 1 else 2) * weight_bytes)
    compiler_kwargs = dict(dimension_semantics=dim_sem)
    if vmem_est > 12 * 1024 * 1024:
        compiler_kwargs["vmem_limit_bytes"] = vmem_est + (4 << 20)

    out = pl.pallas_call(
        kernel,
        out_shape=jax.ShapeDtypeStruct((B, out_pad), jnp.float32),
        grid_spec=pltpu.PrefetchScalarGridSpec(
            num_scalar_prefetch=0,
            grid=grid,
            in_specs=[
                pl.BlockSpec((batch_tile, obs_dim), lambda i: (i, 0)),
                w_spec(w1.shape), w_spec(b1.shape),
                w_spec(w2.shape), w_spec(b2.shape),
                w_spec(w3.shape), w_spec(b3.shape),
            ],
            out_specs=pl.BlockSpec((batch_tile, out_pad), lambda i: (i, 0)),
        ),
        compiler_params=pltpu.CompilerParams(**compiler_kwargs),
        cost_estimate=pl.CostEstimate(
            flops=flops,
            transcendentals=B * out_pad,
            bytes_accessed=bytes_accessed,
        ),
    )(x, w1, b1, w2, b2, w3, b3)

    probs = out[:, :action_dim]
    value = out[:, action_dim:action_dim + 1]
    return probs, value


def init_params(key, obs_dim, action_dim, hidden_size=64):
    """Deterministic synthetic params.  Weight layout: [in, out]; bias: [1, out]."""
    def linear_init(k, fan_in, fan_out):
        kw, kb = jax.random.split(k)
        bound = 1.0 / jnp.sqrt(jnp.float32(fan_in))
        w = jax.random.uniform(kw, (fan_in, fan_out), jnp.float32, -bound, bound)
        b = jax.random.uniform(kb, (1, fan_out), jnp.float32, -bound, bound)
        return w, b

    keys = jax.random.split(key, 6)
    wa1, ba1 = linear_init(keys[0], obs_dim, hidden_size)
    wa2, ba2 = linear_init(keys[1], hidden_size, hidden_size)
    wa3, ba3 = linear_init(keys[2], hidden_size, action_dim)
    wc1, bc1 = linear_init(keys[3], obs_dim, hidden_size)
    wc2, bc2 = linear_init(keys[4], hidden_size, hidden_size)
    wc3, bc3 = linear_init(keys[5], hidden_size, 1)
    return dict(
        wa1=wa1, ba1=ba1, wa2=wa2, ba2=ba2, wa3=wa3, ba3=ba3,
        wc1=wc1, bc1=bc1, wc2=wc2, bc2=bc2, wc3=wc3, bc3=bc3,
    )


def reference_forward(x, p):
    """Pure-JAX reference mirroring the PyTorch module exactly."""
    h = jnp.maximum(x @ p["wa1"] + p["ba1"], 0.0)
    h = jnp.maximum(h @ p["wa2"] + p["ba2"], 0.0)
    logits = h @ p["wa3"] + p["ba3"]
    probs = jax.nn.softmax(logits, axis=-1)
    g = jnp.maximum(x @ p["wc1"] + p["bc1"], 0.0)
    g = jnp.maximum(g @ p["wc2"] + p["bc2"], 0.0)
    value = g @ p["wc3"] + p["bc3"]
    return probs, value


if __name__ == "__main__":
    B, OBS_DIM, ACTION_DIM, HIDDEN = 64, 16, 8, 64

    key = jax.random.PRNGKey(0)
    kx, kp = jax.random.split(key)
    x = jax.random.normal(kx, (B, OBS_DIM), jnp.float32)
    params = init_params(kp, OBS_DIM, ACTION_DIM, HIDDEN)

    # Pack ONCE (this is the init-time cost); forward calls reuse `packed`.
    packed = jax.tree_util.tree_map(
        lambda v: jax.block_until_ready(v) if isinstance(v, jax.Array) else v,
        pack_params(params))

    # Default tiling: B=64 -> single grid step (M=64), no per-step loop overhead.
    probs, value = actor_critic_forward(x, packed)
    jax.block_until_ready((probs, value))

    # Sanity check against pure-JAX reference.
    probs_ref, value_ref = reference_forward(x, params)
    assert probs.shape == (B, ACTION_DIM) and value.shape == (B, 1)
    assert jnp.allclose(probs, probs_ref, atol=1e-5, rtol=1e-5)
    assert jnp.allclose(value, value_ref, atol=1e-5, rtol=1e-5)
    assert jnp.allclose(jnp.sum(probs, axis=-1), 1.0, atol=1e-5)

    print("KERNEL_OK")
</pallas_src>

<mosaic_0001>
module attributes {stable_mosaic.version = 11 : i64} {
  func.func @actor_critic_kernel(%arg0: i32, %arg1: memref<64x16xf32, #tpu.memory_space<vmem>>, %arg2: memref<16x128xf32, #tpu.memory_space<vmem>>, %arg3: memref<1x128xf32, #tpu.memory_space<vmem>>, %arg4: memref<128x128xf32, #tpu.memory_space<vmem>>, %arg5: memref<1x128xf32, #tpu.memory_space<vmem>>, %arg6: memref<128x128xf32, #tpu.memory_space<vmem>>, %arg7: memref<1x128xf32, #tpu.memory_space<vmem>>, %arg8: memref<64x128xf32, #tpu.memory_space<vmem>>) attributes {dimension_semantics = [#tpu.dimension_semantics<arbitrary>], iteration_bounds = array<i64: 1>, scalar_prefetch = 0 : i64, scratch_operands = 0 : i64, tpu.core_type = #tpu.core_type<tc>, window_params = [{transform_indices = @transform_0, window_bounds = array<i64: 64, 16>}, {pipeline_mode = #tpu.pipeline_mode<synchronous>, transform_indices = @transform_1, window_bounds = array<i64: 16, 128>}, {pipeline_mode = #tpu.pipeline_mode<synchronous>, transform_indices = @transform_2, window_bounds = array<i64: 1, 128>}, {pipeline_mode = #tpu.pipeline_mode<synchronous>, transform_indices = @transform_3, window_bounds = array<i64: 128, 128>}, {pipeline_mode = #tpu.pipeline_mode<synchronous>, transform_indices = @transform_4, window_bounds = array<i64: 1, 128>}, {pipeline_mode = #tpu.pipeline_mode<synchronous>, transform_indices = @transform_5, window_bounds = array<i64: 128, 128>}, {pipeline_mode = #tpu.pipeline_mode<synchronous>, transform_indices = @transform_6, window_bounds = array<i64: 1, 128>}, {transform_indices = @transform_7, window_bounds = array<i64: 64, 128>}]} {
    %c0 = arith.constant 0 : index
    %c0_0 = arith.constant 0 : index
    %0 = vector.load %arg1[%c0, %c0_0] : memref<64x16xf32, #tpu.memory_space<vmem>>, vector<64x16xf32>
    %c0_1 = arith.constant 0 : index
    %c0_2 = arith.constant 0 : index
    %1 = vector.load %arg2[%c0_1, %c0_2] : memref<16x128xf32, #tpu.memory_space<vmem>>, vector<16x128xf32>
    %cst = arith.constant dense<0.000000e+00> : vector<64x128xf32>
    %2 = tpu.matmul %0, %1, %cst {dimension_numbers = #tpu.dot_dimension_numbers<[1], [0], [0], [1], [0, 0, 1, 1], [], []>} : vector<64x16xf32>, vector<16x128xf32>, vector<64x128xf32> -> vector<64x128xf32>
    %c0_3 = arith.constant 0 : index
    %c0_4 = arith.constant 0 : index
    %3 = vector.load %arg3[%c0_3, %c0_4] : memref<1x128xf32, #tpu.memory_space<vmem>>, vector<1x128xf32>
    %4 = vector.broadcast %3 : vector<1x128xf32> to vector<64x128xf32>
    %5 = arith.addf %2, %4 : vector<64x128xf32>
    %cst_5 = arith.constant 0.000000e+00 : f32
    %6 = vector.broadcast %cst_5 : f32 to vector<64x128xf32>
    %7 = arith.maximumf %5, %6 : vector<64x128xf32>
    %c0_6 = arith.constant 0 : index
    %c0_7 = arith.constant 0 : index
    %8 = vector.load %arg4[%c0_6, %c0_7] : memref<128x128xf32, #tpu.memory_space<vmem>>, vector<128x128xf32>
    %cst_8 = arith.constant dense<0.000000e+00> : vector<64x128xf32>
    %9 = tpu.matmul %7, %8, %cst_8 {dimension_numbers = #tpu.dot_dimension_numbers<[1], [0], [0], [1], [0, 0, 1, 1], [], []>} : vector<64x128xf32>, vector<128x128xf32>, vector<64x128xf32> -> vector<64x128xf32>
    %c0_9 = arith.constant 0 : index
    %c0_10 = arith.constant 0 : index
    %10 = vector.load %arg5[%c0_9, %c0_10] : memref<1x128xf32, #tpu.memory_space<vmem>>, vector<1x128xf32>
    %11 = vector.broadcast %10 : vector<1x128xf32> to vector<64x128xf32>
    %12 = arith.addf %9, %11 : vector<64x128xf32>
    %cst_11 = arith.constant 0.000000e+00 : f32
    %13 = vector.broadcast %cst_11 : f32 to vector<64x128xf32>
    %14 = arith.maximumf %12, %13 : vector<64x128xf32>
    %c0_12 = arith.constant 0 : index
    %c0_13 = arith.constant 0 : index
    %15 = vector.load %arg6[%c0_12, %c0_13] : memref<128x128xf32, #tpu.memory_space<vmem>>, vector<128x128xf32>
    %cst_14 = arith.constant dense<0.000000e+00> : vector<64x128xf32>
    %16 = tpu.matmul %14, %15, %cst_14 {dimension_numbers = #tpu.dot_dimension_numbers<[1], [0], [0], [1], [0, 0, 1, 1], [], []>} : vector<64x128xf32>, vector<128x128xf32>, vector<64x128xf32> -> vector<64x128xf32>
    %c0_15 = arith.constant 0 : index
    %c0_16 = arith.constant 0 : index
    %17 = vector.load %arg7[%c0_15, %c0_16] : memref<1x128xf32, #tpu.memory_space<vmem>>, vector<1x128xf32>
    %18 = vector.broadcast %17 : vector<1x128xf32> to vector<64x128xf32>
    %19 = arith.addf %16, %18 : vector<64x128xf32>
    %20 = tpu.iota {dimensions = array<i32: 1>} : vector<64x128xi32>
    %c8_i32 = arith.constant 8 : i32
    %21 = vector.broadcast %c8_i32 : i32 to vector<64x128xi32>
    %22 = arith.cmpi slt, %20, %21 : vector<64x128xi32>
    %cst_17 = arith.constant 0xFF800000 : f32
    %23 = vector.broadcast %cst_17 : f32 to vector<64x128xf32>
    %24 = arith.select %22, %19, %23 : vector<64x128xi1>, vector<64x128xf32>
    %cst_18 = arith.constant dense<0xFF800000> : vector<64xf32>
    %25 = vector.multi_reduction <maximumf>, %24, %cst_18 [1] : vector<64x128xf32> to vector<64xf32>
    %26 = vector.shape_cast %25 : vector<64xf32> to vector<64x1xf32>
    %27 = vector.broadcast %26 : vector<64x1xf32> to vector<64x128xf32>
    %28 = arith.subf %24, %27 : vector<64x128xf32>
    %29 = math.exp %28 : vector<64x128xf32>
    %cst_19 = arith.constant dense<0.000000e+00> : vector<64xf32>
    %30 = vector.multi_reduction <add>, %29, %cst_19 [1] : vector<64x128xf32> to vector<64xf32>
    %31 = vector.shape_cast %30 : vector<64xf32> to vector<64x1xf32>
    %32 = tpu.reciprocal %31 : vector<64x1xf32> -> vector<64x1xf32>
    %33 = vector.broadcast %32 : vector<64x1xf32> to vector<64x128xf32>
    %34 = arith.mulf %29, %33 : vector<64x128xf32>
    %c8_i32_20 = arith.constant 8 : i32
    %35 = vector.broadcast %c8_i32_20 : i32 to vector<64x128xi32>
    %36 = arith.cmpi slt, %20, %35 : vector<64x128xi32>
    %37 = arith.select %36, %34, %19 : vector<64x128xi1>, vector<64x128xf32>
    %c0_21 = arith.constant 0 : index
    %c0_22 = arith.constant 0 : index
    %38 = vector.load %arg8[%c0_21, %c0_22] : memref<64x128xf32, #tpu.memory_space<vmem>>, vector<64x128xf32>
    tpu.vector_store %arg8[%c0_21, %c0_22], %37 {strides = array<i32>} : memref<64x128xf32, #tpu.memory_space<vmem>>, vector<64x128xf32>,
    return
  }
  func.func @transform_0(%arg0: i32) -> (i32, i32) {
    %c0_i32 = arith.constant 0 : i32
    %c0_i32_0 = arith.constant 0 : i32
    return %arg0, %c0_i32 : i32, i32
  }
  func.func @transform_1(%arg0: i32) -> (i32, i32) {
    %c0_i32 = arith.constant 0 : i32
    %c0_i32_0 = arith.constant 0 : i32
    %c0_i32_1 = arith.constant 0 : i32
    return %c0_i32, %c0_i32_0 : i32, i32
  }
  func.func @transform_2(%arg0: i32) -> (i32, i32) {
    %c0_i32 = arith.constant 0 : i32
    %c0_i32_0 = arith.constant 0 : i32
    %c0_i32_1 = arith.constant 0 : i32
    return %c0_i32, %c0_i32_0 : i32, i32
  }
  func.func @transform_3(%arg0: i32) -> (i32, i32) {
    %c0_i32 = arith.constant 0 : i32
    %c0_i32_0 = arith.constant 0 : i32
    %c0_i32_1 = arith.constant 0 : i32
    return %c0_i32, %c0_i32_0 : i32, i32
  }
  func.func @transform_4(%arg0: i32) -> (i32, i32) {
    %c0_i32 = arith.constant 0 : i32
    %c0_i32_0 = arith.constant 0 : i32
    %c0_i32_1 = arith.constant 0 : i32
    return %c0_i32, %c0_i32_0 : i32, i32
  }
  func.func @transform_5(%arg0: i32) -> (i32, i32) {
    %c0_i32 = arith.constant 0 : i32
    %c0_i32_0 = arith.constant 0 : i32
    %c0_i32_1 = arith.constant 0 : i32
    return %c0_i32, %c0_i32_0 : i32, i32
  }
  func.func @transform_6(%arg0: i32) -> (i32, i32) {
    %c0_i32 = arith.constant 0 : i32
    %c0_i32_0 = arith.constant 0 : i32
    %c0_i32_1 = arith.constant 0 : i32
    return %c0_i32, %c0_i32_0 : i32, i32
  }
  func.func @transform_7(%arg0: i32) -> (i32, i32) {
    %c0_i32 = arith.constant 0 : i32
    %c0_i32_0 = arith.constant 0 : i32
    return %arg0, %c0_i32 : i32, i32
  }
}

</mosaic_0001>

<llo_original>
// kernel: tpu_custom_call.1
$region0: #{tpu_custom_call.1}
  #allocation0 [shape = 'u32[]', space=smem, size = 0x4, offset = 0x4, fixed_abs, tag = 'smem constant byte address 0x4 - core index']
  #allocation1 [shape = 'u32[144,128]{1,0:T(1,128)}', space=vmem, size = 0x12000, scoped, tag = 'internal scratch']
  %s0 = inlined_call_operand.vmem [shape: f32[64,16], index: 0, kind: input, shape index: {}]
  %s1 = inlined_call_operand.vmem [shape: f32[16,128], index: 1, kind: input, shape index: {}]
  %s2 = inlined_call_operand.vmem [shape: f32[1,128], index: 2, kind: input, shape index: {}]
  %s3 = inlined_call_operand.hbm [shape: f32[128,128], index: 3, kind: input, shape index: {}]
  %s4 = inlined_call_operand.vmem [shape: f32[1,128], index: 4, kind: input, shape index: {}]
  %s5 = inlined_call_operand.hbm [shape: f32[128,128], index: 5, kind: input, shape index: {}]
  %s6 = inlined_call_operand.vmem [shape: f32[1,128], index: 6, kind: input, shape index: {}]
  %s7 = inlined_call_operand.hbm [shape: f32[64,128], index: 7, kind: output, shape index: {}]
  %s8 = sld [smem:[#allocation0]]
  $region46: #{tpu_custom_call.1} parent=0
    _
  %s10 = ssub.s32 1, %s8
  %s11 = scalar_select 0, %s10, %s8
  $region1: #{tpu_custom_call.1} parent=0
    #allocation2 [shape = 'u8[65536]{0}', space=vmem, size = 0x10000, scoped, tag = 'input window, operand 3, single buffered']
    #allocation3 [shape = 's32[1]{0}', space=sflag, size = 0x4, scoped, tag = 'scoped memory for tpu_custom_call.1']
    #allocation4 [shape = 's32[1]{0}', space=sflag, size = 0x4, scoped, tag = 'scoped memory for tpu_custom_call.1']
    #allocation5 [shape = 'u8[65536]{0}', space=vmem, size = 0x10000, scoped, tag = 'input window, operand 5, single buffered']
    #allocation6 [shape = 's32[1]{0}', space=sflag, size = 0x4, scoped, tag = 'scoped memory for tpu_custom_call.1']
    #allocation7 [shape = 'u8[32768]{0}', space=vmem, size = 0x8000, scoped, tag = 'output window, operand 0, single buffered']
    %12 = vsyncpa [#allocation3], 0
    %13 = vsyncpa [#allocation6], 0
    %14 = vsyncpa [#allocation4], 0
    // Predicated region
    $region2: #{tpu_custom_call.1} parent=1 // pred_check
      _
    $region3: #{tpu_custom_call.1} parent=1 // pred_check_branch
      %16 = sbr.rel (0) target = $region5
    $region4: #{tpu_custom_call.1} parent=1 // pred_region
      _
    $region5: #{tpu_custom_call.1} parent=1 // pred_fallthru
      _
    // Predicated region
    $region6: #{tpu_custom_call.1} parent=1 // pred_check
      _
    $region7: #{tpu_custom_call.1} parent=1 // pred_check_branch
      %18 = sbr.rel (0) target = $region9
    $region8: #{tpu_custom_call.1} parent=1 // pred_region
      _
    $region9: #{tpu_custom_call.1} parent=1 // pred_fallthru
      _
    // Predicated region
    $region10: #{tpu_custom_call.1} parent=1 // pred_check
      _
    $region11: #{tpu_custom_call.1} parent=1 // pred_check_branch
      %20 = sbr.rel (0) target = $region13
    $region12: #{tpu_custom_call.1} parent=1 // pred_region
      _
    $region13: #{tpu_custom_call.1} parent=1 // pred_fallthru
      _
    // Predicated region
    $region14: #{tpu_custom_call.1} parent=1 // pred_check
      _
    $region15: #{tpu_custom_call.1} parent=1 // pred_check_branch
      %22 = sbr.rel (0) target = $region17
    $region16: #{tpu_custom_call.1} parent=1 // pred_region
      %s24 = ssub.s32 2048, 2048
      %25 = vsyncadd [#allocation3], %s24
      %s26 = sshll.u32 [#allocation2], 4
      %s27 = int_to_ptr.vmem [resolvable:$true] %s26
      %32 = dma.hbm_to_vmem [thread:$0]  %s3, 2048, %s27, [#allocation3], 128, 128, 8
    $region17: #{tpu_custom_call.1} parent=1 // pred_fallthru
      _
    // Predicated region
    $region18: #{tpu_custom_call.1} parent=1 // pred_check
      _
    $region19: #{tpu_custom_call.1} parent=1 // pred_check_branch
      %34 = sbr.rel (0) target = $region21
    $region20: #{tpu_custom_call.1} parent=1 // pred_region
      _
    $region21: #{tpu_custom_call.1} parent=1 // pred_fallthru
      _
    // Predicated region
    $region22: #{tpu_custom_call.1} parent=1 // pred_check
      _
    $region23: #{tpu_custom_call.1} parent=1 // pred_check_branch
      %36 = sbr.rel (0) target = $region25
    $region24: #{tpu_custom_call.1} parent=1 // pred_region
      %s38 = ssub.s32 2048, 2048
      %39 = vsyncadd [#allocation6], %s38
      %s40 = sshll.u32 [#allocation5], 4
      %s41 = int_to_ptr.vmem [resolvable:$true] %s40
      %46 = dma.hbm_to_vmem [thread:$0]  %s5, 2048, %s41, [#allocation6], 128, 128, 8
    $region25: #{tpu_custom_call.1} parent=1 // pred_fallthru
      _
    // Predicated region
    $region26: #{tpu_custom_call.1} parent=1 // pred_check
      _
    $region27: #{tpu_custom_call.1} parent=1 // pred_check_branch
      %48 = sbr.rel (0) target = $region29
    $region28: #{tpu_custom_call.1} parent=1 // pred_region
      _
    $region29: #{tpu_custom_call.1} parent=1 // pred_fallthru
      _
    // Predicated region
    $region30: #{tpu_custom_call.1} parent=1 // pred_check
      _
    $region31: #{tpu_custom_call.1} parent=1 // pred_check_branch
      %50 = sbr.rel (0) target = $region33
    $region32: #{tpu_custom_call.1} parent=1 // pred_region
      %51 = dma.done [#allocation3], 2048
    $region33: #{tpu_custom_call.1} parent=1 // pred_fallthru
      _
    // Predicated region
    $region34: #{tpu_custom_call.1} parent=1 // pred_check
      _
    $region35: #{tpu_custom_call.1} parent=1 // pred_check_branch
      %53 = sbr.rel (0) target = $region37
    $region36: #{tpu_custom_call.1} parent=1 // pred_region
      %54 = dma.done [#allocation6], 2048
    $region37: #{tpu_custom_call.1} parent=1 // pred_fallthru
      _
    %v55 = vld [vmem:[%s0] sm:$0xff]
    %v56 = vld [vmem:[%s0 + $0x8] sm:$0xff]
    %v57 = vld [vmem:[%s0 + $0x10] sm:$0xff]
    %v58 = vld [vmem:[%s0 + $0x18] sm:$0xff]
    %v59 = vld [vmem:[%s0 + $0x20] sm:$0xff]
    %v60 = vld [vmem:[%s0 + $0x28] sm:$0xff]
    %v61 = vld [vmem:[%s0 + $0x30] sm:$0xff]
    %v62 = vld [vmem:[%s0 + $0x38] sm:$0xff]
    %v63 = vld [vmem:[%s1] sm:$0xff]
    %v64 = vld [vmem:[%s1 + $0x8] sm:$0xff]
    %v65 = vld [vmem:[%s2] sm:$0x1]
    %v67 = vlaneseq
    %v68 = vshrl.u32 %v67, 7
    %v69 = vsub.s32 0, %v68
    %v70 = vrot.slane %v65, %v69
    %vm72 = vcmask 130048
    %v74 = vsel %vm72, %v55, 0
    %v77 = vsel %vm72, %v56, 0
    %v80 = vsel %vm72, %v57, 0
    %v83 = vsel %vm72, %v58, 0
    %v86 = vsel %vm72, %v59, 0
    %v89 = vsel %vm72, %v60, 0
    %v92 = vsel %vm72, %v61, 0
    %v95 = vsel %vm72, %v62, 0
    %97 = vmatprep.subr.mxu0 0.0
    %98 = vmatpush1.msra.mxu0 %v63
    %99 = vmatprep.subr.mxu0 0.0
    %100 = vmatpush1.msra.mxu0 %v64
    %101 = vmatprep.subr.mxu0 0.0
    %102 = vmatpush1.msra.mxu0 0.0
    %103 = vmatprep.subr.mxu0 0.0
    %104 = vmatpush1.msra.mxu0 0.0
    %105 = vmatprep.subr.mxu0 0.0
    %106 = vmatpush1.msra.mxu0 0.0
    %107 = vmatprep.subr.mxu0 0.0
    %108 = vmatpush1.msra.mxu0 0.0
    %109 = vmatprep.subr.mxu0 0.0
    %110 = vmatpush1.msra.mxu0 0.0
    %111 = vmatprep.subr.mxu0 0.0
    %112 = vmatpush1.msra.mxu0 0.0
    %113 = vmatprep.subr.mxu0 0.0
    %114 = vmatpush1.msra.mxu0 0.0
    %115 = vmatprep.subr.mxu0 0.0
    %116 = vmatpush1.msra.mxu0 0.0
    %117 = vmatprep.subr.mxu0 0.0
    %118 = vmatpush1.msra.mxu0 0.0
    %119 = vmatprep.subr.mxu0 0.0
    %120 = vmatpush1.msra.mxu0 0.0
    %121 = vmatprep.subr.mxu0 0.0
    %122 = vmatpush1.msra.mxu0 0.0
    %123 = vmatprep.subr.mxu0 0.0
    %124 = vmatpush1.msra.mxu0 0.0
    %125 = vmatprep.subr.mxu0 0.0
    %126 = vmatpush1.msra.mxu0 0.0
    %127 = vmatprep.subr.mxu0 0.0
    %128 = vmatpush1.msra.mxu0 0.0
    %129 = vmatprep.subr.mxu0 0.0
    %130 = vmatpush1.msra.mxu0 0.0
    %131 = vmatprep.subr.mxu0 0.0
    %132 = vmatpush1.msra.mxu0 0.0
    %133 = vmatprep.subr.mxu0 0.0
    %134 = vmatpush1.msra.mxu0 0.0
    %135 = vmatprep.subr.mxu0 0.0
    %136 = vmatpush1.msra.mxu0 0.0
    %137 = vmatprep.subr.mxu0 0.0
    %138 = vmatpush1.msra.mxu0 0.0
    %139 = vmatprep.subr.mxu0 0.0
    %140 = vmatpush1.msra.mxu0 0.0
    %141 = vmatprep.subr.mxu0 0.0
    %142 = vmatpush1.msra.mxu0 0.0
    %143 = vmatprep.subr.mxu0 0.0
    %144 = vmatpush1.msra.mxu0 0.0
    %145 = vmatprep.subr.mxu0 0.0
    %146 = vmatpush1.msra.mxu0 0.0
    %147 = vmatprep.subr.mxu0 0.0
    %148 = vmatpush1.msra.mxu0 0.0
    %149 = vmatprep.subr.mxu0 0.0
    %150 = vmatpush1.msra.mxu0 0.0
    %151 = vmatprep.subr.mxu0 0.0
    %152 = vmatpush1.msra.mxu0 0.0
    %153 = vmatprep.subr.mxu0 0.0
    %154 = vmatpush1.msra.mxu0 0.0
    %155 = vmatprep.subr.mxu0 0.0
    %156 = vmatpush1.msra.mxu0 0.0
    %157 = vmatprep.subr.mxu0 0.0
    %158 = vmatpush1.msra.mxu0 0.0
    %159 = vmatprep.subr.mxu0 0.0
    %160 = vmatpush1.msra.mxu0 0.0
    %161 = vmatprep.mubr.f32.mxu0 0.0
    %162 = vmatmul.mubr.f32.gmra.mrb[0].mxu0 %v74
    %v163 = vpop.f32.mrb[0].mxu0
    %v164 = vadd.f32 %v70, %v163
    %v165 = vpop.f32.mrb[0].mxu0
    %166 = vmatprep.mubr.f32.mxu0 0.0
    %167 = vmatmul.mubr.f32.gmra.mrb[0].mxu0 %v77
    %v168 = vpop.f32.mrb[0].mxu0
    %v169 = vadd.f32 %v70, %v168
    %v170 = vpop.f32.mrb[0].mxu0
    %171 = vmatprep.mubr.f32.mxu0 0.0
    %172 = vmatmul.mubr.f32.gmra.mrb[0].mxu0 %v80
    %v173 = vpop.f32.mrb[0].mxu0
    %v174 = vadd.f32 %v70, %v173
    %v175 = vpop.f32.mrb[0].mxu0
    %176 = vmatprep.mubr.f32.mxu0 0.0
    %177 = vmatmul.mubr.f32.gmra.mrb[0].mxu0 %v83
    %v178 = vpop.f32.mrb[0].mxu0
    %v179 = vadd.f32 %v70, %v178
    %v180 = vpop.f32.mrb[0].mxu0
    %181 = vmatprep.mubr.f32.mxu0 0.0
    %182 = vmatmul.mubr.f32.gmra.mrb[0].mxu0 %v86
    %v183 = vpop.f32.mrb[0].mxu0
    %v184 = vadd.f32 %v70, %v183
    %v185 = vpop.f32.mrb[0].mxu0
    %186 = vmatprep.mubr.f32.mxu0 0.0
    %187 = vmatmul.mubr.f32.gmra.mrb[0].mxu0 %v89
    %v188 = vpop.f32.mrb[0].mxu0
    %v189 = vadd.f32 %v70, %v188
    %v190 = vpop.f32.mrb[0].mxu0
    %191 = vmatprep.mubr.f32.mxu0 0.0
    %192 = vmatmul.mubr.f32.gmra.mrb[0].mxu0 %v92
    %v193 = vpop.f32.mrb[0].mxu0
    %v194 = vadd.f32 %v70, %v193
    %v195 = vpop.f32.mrb[0].mxu0
    %196 = vmatprep.mubr.f32.mxu0 0.0
    %197 = vmatmul.mubr.f32.gmra.mrb[0].mxu0 %v95
    %v198 = vpop.f32.mrb[0].mxu0
    %v199 = vadd.f32 %v70, %v198
    %v200 = vpop.f32.mrb[0].mxu0
    %201 = vdwg.mxu0
    %v202 = vmax.f32 %v164, 0.0
    %v203 = vmax.f32 %v169, 0.0
    %v204 = vmax.f32 %v174, 0.0
    %v205 = vmax.f32 %v179, 0.0
    %v206 = vmax.f32 %v184, 0.0
    %v207 = vmax.f32 %v189, 0.0
    %v208 = vmax.f32 %v194, 0.0
    %v209 = vmax.f32 %v199, 0.0
    %v210 = vld [vmem:[#allocation2] sm:$0xff]
    %v211 = vld [vmem:[#allocation2 + $0x8] sm:$0xff]
    %v212 = vld [vmem:[#allocation2 + $0x10] sm:$0xff]
    %v213 = vld [vmem:[#allocation2 + $0x18] sm:$0xff]
    %v214 = vld [vmem:[#allocation2 + $0x20] sm:$0xff]
    %v215 = vld [vmem:[#allocation2 + $0x28] sm:$0xff]
    %v216 = vld [vmem:[#allocation2 + $0x30] sm:$0xff]
    %v217 = vld [vmem:[#allocation2 + $0x38] sm:$0xff]
    %v218 = vld [vmem:[#allocation2 + $0x40] sm:$0xff]
    %v219 = vld [vmem:[#allocation2 + $0x48] sm:$0xff]
    %v220 = vld [vmem:[#allocation2 + $0x50] sm:$0xff]
    %v221 = vld [vmem:[#allocation2 + $0x58] sm:$0xff]
    %v222 = vld [vmem:[#allocation2 + $0x60] sm:$0xff]
    %v223 = vld [vmem:[#allocation2 + $0x68] sm:$0xff]
    %v224 = vld [vmem:[#allocation2 + $0x70] sm:$0xff]
    %v225 = vld [vmem:[#allocation2 + $0x78] sm:$0xff]
    %v226 = vld [vmem:[%s4] sm:$0x1]
    %v228 = vlaneseq
    %v229 = vshrl.u32 %v228, 7
    %v230 = vsub.s32 0, %v229
    %v231 = vrot.slane %v226, %v230
    %233 = vmatprep.subr.mxu0 0.0
    %234 = vmatpush1.msra.mxu0 %v210
    %235 = vmatprep.subr.mxu0 0.0
    %236 = vmatpush1.msra.mxu0 %v211
    %237 = vmatprep.subr.mxu0 0.0
    %238 = vmatpush1.msra.mxu0 %v212
    %239 = vmatprep.subr.mxu0 0.0
    %240 = vmatpush1.msra.mxu0 %v213
    %241 = vmatprep.subr.mxu0 0.0
    %242 = vmatpush1.msra.mxu0 %v214
    %243 = vmatprep.subr.mxu0 0.0
    %244 = vmatpush1.msra.mxu0 %v215
    %245 = vmatprep.subr.mxu0 0.0
    %246 = vmatpush1.msra.mxu0 %v216
    %247 = vmatprep.subr.mxu0 0.0
    %248 = vmatpush1.msra.mxu0 %v217
    %249 = vmatprep.subr.mxu0 0.0
    %250 = vmatpush1.msra.mxu0 %v218
    %251 = vmatprep.subr.mxu0 0.0
    %252 = vmatpush1.msra.mxu0 %v219
    %253 = vmatprep.subr.mxu0 0.0
    %254 = vmatpush1.msra.mxu0 %v220
    %255 = vmatprep.subr.mxu0 0.0
    %256 = vmatpush1.msra.mxu0 %v221
    %257 = vmatprep.subr.mxu0 0.0
    %258 = vmatpush1.msra.mxu0 %v222
    %259 = vmatprep.subr.mxu0 0.0
    %260 = vmatpush1.msra.mxu0 %v223
    %261 = vmatprep.subr.mxu0 0.0
    %262 = vmatpush1.msra.mxu0 %v224
    %263 = vmatprep.subr.mxu0 0.0
    %264 = vmatpush1.msra.mxu0 %v225
    %265 = vmatprep.subr.mxu0 0.0
    %266 = vmatpush1.msra.mxu0 0.0
    %267 = vmatprep.subr.mxu0 0.0
    %268 = vmatpush1.msra.mxu0 0.0
    %269 = vmatprep.subr.mxu0 0.0
    %270 = vmatpush1.msra.mxu0 0.0
    %271 = vmatprep.subr.mxu0 0.0
    %272 = vmatpush1.msra.mxu0 0.0
    %273 = vmatprep.subr.mxu0 0.0
    %274 = vmatpush1.msra.mxu0 0.0
    %275 = vmatprep.subr.mxu0 0.0
    %276 = vmatpush1.msra.mxu0 0.0
    %277 = vmatprep.subr.mxu0 0.0
    %278 = vmatpush1.msra.mxu0 0.0
    %279 = vmatprep.subr.mxu0 0.0
    %280 = vmatpush1.msra.mxu0 0.0
    %281 = vmatprep.subr.mxu0 0.0
    %282 = vmatpush1.msra.mxu0 0.0
    %283 = vmatprep.subr.mxu0 0.0
    %284 = vmatpush1.msra.mxu0 0.0
    %285 = vmatprep.subr.mxu0 0.0
    %286 = vmatpush1.msra.mxu0 0.0
    %287 = vmatprep.subr.mxu0 0.0
    %288 = vmatpush1.msra.mxu0 0.0
    %289 = vmatprep.subr.mxu0 0.0
    %290 = vmatpush1.msra.mxu0 0.0
    %291 = vmatprep.subr.mxu0 0.0
    %292 = vmatpush1.msra.mxu0 0.0
    %293 = vmatprep.subr.mxu0 0.0
    %294 = vmatpush1.msra.mxu0 0.0
    %295 = vmatprep.subr.mxu0 0.0
    %296 = vmatpush1.msra.mxu0 0.0
    %297 = vmatprep.mubr.f32.mxu0 0.0
    %298 = vmatmul.mubr.f32.gmra.mrb[0].mxu0 %v202
    %v299 = vpop.f32.mrb[0].mxu0
    %v300 = vadd.f32 %v231, %v299
    %v301 = vpop.f32.mrb[0].mxu0
    %302 = vmatprep.mubr.f32.mxu0 0.0
    %303 = vmatmul.mubr.f32.gmra.mrb[0].mxu0 %v203
    %v304 = vpop.f32.mrb[0].mxu0
    %v305 = vadd.f32 %v231, %v304
    %v306 = vpop.f32.mrb[0].mxu0
    %307 = vmatprep.mubr.f32.mxu0 0.0
    %308 = vmatmul.mubr.f32.gmra.mrb[0].mxu0 %v204
    %v309 = vpop.f32.mrb[0].mxu0
    %v310 = vadd.f32 %v231, %v309
    %v311 = vpop.f32.mrb[0].mxu0
    %312 = vmatprep.mubr.f32.mxu0 0.0
    %313 = vmatmul.mubr.f32.gmra.mrb[0].mxu0 %v205
    %v314 = vpop.f32.mrb[0].mxu0
    %v315 = vadd.f32 %v231, %v314
    %v316 = vpop.f32.mrb[0].mxu0
    %317 = vmatprep.mubr.f32.mxu0 0.0
    %318 = vmatmul.mubr.f32.gmra.mrb[0].mxu0 %v206
    %v319 = vpop.f32.mrb[0].mxu0
    %v320 = vadd.f32 %v231, %v319
    %v321 = vpop.f32.mrb[0].mxu0
    %322 = vmatprep.mubr.f32.mxu0 0.0
    %323 = vmatmul.mubr.f32.gmra.mrb[0].mxu0 %v207
    %v324 = vpop.f32.mrb[0].mxu0
    %v325 = vadd.f32 %v231, %v324
    %v326 = vpop.f32.mrb[0].mxu0
    %327 = vmatprep.mubr.f32.mxu0 0.0
    %328 = vmatmul.mubr.f32.gmra.mrb[0].mxu0 %v208
    %v329 = vpop.f32.mrb[0].mxu0
    %v330 = vadd.f32 %v231, %v329
    %v331 = vpop.f32.mrb[0].mxu0
    %332 = vmatprep.mubr.f32.mxu0 0.0
    %333 = vmatmul.mubr.f32.gmra.mrb[0].mxu0 %v209
    %v334 = vpop.f32.mrb[0].mxu0
    %v335 = vadd.f32 %v231, %v334
    %v336 = vpop.f32.mrb[0].mxu0
    %337 = vdwg.mxu0
    %v338 = vmax.f32 %v300, 0.0
    %v339 = vmax.f32 %v305, 0.0
    %v340 = vmax.f32 %v310, 0.0
    %v341 = vmax.f32 %v315, 0.0
    %v342 = vmax.f32 %v320, 0.0
    %v343 = vmax.f32 %v325, 0.0
    %v344 = vmax.f32 %v330, 0.0
    %v345 = vmax.f32 %v335, 0.0
    %v346 = vld [vmem:[#allocation5] sm:$0xff]
    %v347 = vld [vmem:[#allocation5 + $0x8] sm:$0xff]
    %v348 = vld [vmem:[#allocation5 + $0x10] sm:$0xff]
    %v349 = vld [vmem:[#allocation5 + $0x18] sm:$0xff]
    %v350 = vld [vmem:[#allocation5 + $0x20] sm:$0xff]
    %v351 = vld [vmem:[#allocation5 + $0x28] sm:$0xff]
    %v352 = vld [vmem:[#allocation5 + $0x30] sm:$0xff]
    %v353 = vld [vmem:[#allocation5 + $0x38] sm:$0xff]
    %v354 = vld [vmem:[#allocation5 + $0x40] sm:$0xff]
    %v355 = vld [vmem:[#allocation5 + $0x48] sm:$0xff]
    %v356 = vld [vmem:[#allocation5 + $0x50] sm:$0xff]
    %v357 = vld [vmem:[#allocation5 + $0x58] sm:$0xff]
    %v358 = vld [vmem:[#allocation5 + $0x60] sm:$0xff]
    %v359 = vld [vmem:[#allocation5 + $0x68] sm:$0xff]
    %v360 = vld [vmem:[#allocation5 + $0x70] sm:$0xff]
    %v361 = vld [vmem:[#allocation5 + $0x78] sm:$0xff]
    %v362 = vld [vmem:[%s6] sm:$0x1]
    %v364 = vlaneseq
    %v365 = vshrl.u32 %v364, 7
    %v366 = vsub.s32 0, %v365
    %v367 = vrot.slane %v362, %v366
    %369 = vmatprep.subr.mxu0 0.0
    %370 = vmatpush1.msra.mxu0 %v346
    %371 = vmatprep.subr.mxu0 0.0
    %372 = vmatpush1.msra.mxu0 %v347
    %373 = vmatprep.subr.mxu0 0.0
    %374 = vmatpush1.msra.mxu0 %v348
    %375 = vmatprep.subr.mxu0 0.0
    %376 = vmatpush1.msra.mxu0 %v349
    %377 = vmatprep.subr.mxu0 0.0
    %378 = vmatpush1.msra.mxu0 %v350
    %379 = vmatprep.subr.mxu0 0.0
    %380 = vmatpush1.msra.mxu0 %v351
    %381 = vmatprep.subr.mxu0 0.0
    %382 = vmatpush1.msra.mxu0 %v352
    %383 = vmatprep.subr.mxu0 0.0
    %384 = vmatpush1.msra.mxu0 %v353
    %385 = vmatprep.subr.mxu0 0.0
    %386 = vmatpush1.msra.mxu0 %v354
    %387 = vmatprep.subr.mxu0 0.0
    %388 = vmatpush1.msra.mxu0 %v355
    %389 = vmatprep.subr.mxu0 0.0
    %390 = vmatpush1.msra.mxu0 %v356
    %391 = vmatprep.subr.mxu0 0.0
    %392 = vmatpush1.msra.mxu0 %v357
    %393 = vmatprep.subr.mxu0 0.0
    %394 = vmatpush1.msra.mxu0 %v358
    %395 = vmatprep.subr.mxu0 0.0
    %396 = vmatpush1.msra.mxu0 %v359
    %397 = vmatprep.subr.mxu0 0.0
    %398 = vmatpush1.msra.mxu0 %v360
    %399 = vmatprep.subr.mxu0 0.0
    %400 = vmatpush1.msra.mxu0 %v361
    %401 = vmatprep.subr.mxu0 0.0
    %402 = vmatpush1.msra.mxu0 0.0
    %403 = vmatprep.subr.mxu0 0.0
    %404 = vmatpush1.msra.mxu0 0.0
    %405 = vmatprep.subr.mxu0 0.0
    %406 = vmatpush1.msra.mxu0 0.0
    %407 = vmatprep.subr.mxu0 0.0
    %408 = vmatpush1.msra.mxu0 0.0
    %409 = vmatprep.subr.mxu0 0.0
    %410 = vmatpush1.msra.mxu0 0.0
    %411 = vmatprep.subr.mxu0 0.0
    %412 = vmatpush1.msra.mxu0 0.0
    %413 = vmatprep.subr.mxu0 0.0
    %414 = vmatpush1.msra.mxu0 0.0
    %415 = vmatprep.subr.mxu0 0.0
    %416 = vmatpush1.msra.mxu0 0.0
    %417 = vmatprep.subr.mxu0 0.0
    %418 = vmatpush1.msra.mxu0 0.0
    %419 = vmatprep.subr.mxu0 0.0
    %420 = vmatpush1.msra.mxu0 0.0
    %421 = vmatprep.subr.mxu0 0.0
    %422 = vmatpush1.msra.mxu0 0.0
    %423 = vmatprep.subr.mxu0 0.0
    %424 = vmatpush1.msra.mxu0 0.0
    %425 = vmatprep.subr.mxu0 0.0
    %426 = vmatpush1.msra.mxu0 0.0
    %427 = vmatprep.subr.mxu0 0.0
    %428 = vmatpush1.msra.mxu0 0.0
    %429 = vmatprep.subr.mxu0 0.0
    %430 = vmatpush1.msra.mxu0 0.0
    %431 = vmatprep.subr.mxu0 0.0
    %432 = vmatpush1.msra.mxu0 0.0
    %433 = vmatprep.mubr.f32.mxu0 0.0
    %434 = vmatmul.mubr.f32.gmra.mrb[0].mxu0 %v338
    %v435 = vpop.f32.mrb[0].mxu0
    %v436 = vadd.f32 %v367, %v435
    %v437 = vpop.f32.mrb[0].mxu0
    %438 = vmatprep.mubr.f32.mxu0 0.0
    %439 = vmatmul.mubr.f32.gmra.mrb[0].mxu0 %v339
    %v440 = vpop.f32.mrb[0].mxu0
    %v441 = vadd.f32 %v367, %v440
    %v442 = vpop.f32.mrb[0].mxu0
    %443 = vmatprep.mubr.f32.mxu0 0.0
    %444 = vmatmul.mubr.f32.gmra.mrb[0].mxu0 %v340
    %v445 = vpop.f32.mrb[0].mxu0
    %v446 = vadd.f32 %v367, %v445
    %v447 = vpop.f32.mrb[0].mxu0
    %448 = vmatprep.mubr.f32.mxu0 0.0
    %449 = vmatmul.mubr.f32.gmra.mrb[0].mxu0 %v341
    %v450 = vpop.f32.mrb[0].mxu0
    %v451 = vadd.f32 %v367, %v450
    %v452 = vpop.f32.mrb[0].mxu0
    %453 = vmatprep.mubr.f32.mxu0 0.0
    %454 = vmatmul.mubr.f32.gmra.mrb[0].mxu0 %v342
    %v455 = vpop.f32.mrb[0].mxu0
    %v456 = vadd.f32 %v367, %v455
    %v457 = vpop.f32.mrb[0].mxu0
    %458 = vmatprep.mubr.f32.mxu0 0.0
    %459 = vmatmul.mubr.f32.gmra.mrb[0].mxu0 %v343
    %v460 = vpop.f32.mrb[0].mxu0
    %v461 = vadd.f32 %v367, %v460
    %v462 = vpop.f32.mrb[0].mxu0
    %463 = vmatprep.mubr.f32.mxu0 0.0
    %464 = vmatmul.mubr.f32.gmra.mrb[0].mxu0 %v344
    %v465 = vpop.f32.mrb[0].mxu0
    %v466 = vadd.f32 %v367, %v465
    %v467 = vpop.f32.mrb[0].mxu0
    %468 = vmatprep.mubr.f32.mxu0 0.0
    %469 = vmatmul.mubr.f32.gmra.mrb[0].mxu0 %v345
    %v470 = vpop.f32.mrb[0].mxu0
    %v471 = vadd.f32 %v367, %v470
    %v472 = vpop.f32.mrb[0].mxu0
    %473 = vdwg.mxu0
    %v474 = vlaneseq
    %v475 = vand.u32 %v474, 127
    %vm476 = vcmp.lt.s32.totalorder %v475, 8
    %v477 = vsel %vm476, %v436, -inf
    %v478 = vsel %vm476, %v441, -inf
    %v479 = vsel %vm476, %v446, -inf
    %v480 = vsel %vm476, %v451, -inf
    %v481 = vsel %vm476, %v456, -inf
    %v482 = vsel %vm476, %v461, -inf
    %v483 = vsel %vm476, %v466, -inf
    %v484 = vsel %vm476, %v471, -inf
    %485 = vmax.xlane.f32.xlu0 %v477
    %v486 = vpop.xlane.xlu0 %485
    %487 = vmax.xlane.f32.xlu0 %v478
    %v488 = vpop.xlane.xlu0 %487
    %489 = vmax.xlane.f32.xlu0 %v479
    %v490 = vpop.xlane.xlu0 %489
    %491 = vmax.xlane.f32.xlu0 %v480
    %v492 = vpop.xlane.xlu0 %491
    %493 = vmax.xlane.f32.xlu0 %v481
    %v494 = vpop.xlane.xlu0 %493
    %495 = vmax.xlane.f32.xlu0 %v482
    %v496 = vpop.xlane.xlu0 %495
    %497 = vmax.xlane.f32.xlu0 %v483
    %v498 = vpop.xlane.xlu0 %497
    %499 = vmax.xlane.f32.xlu0 %v484
    %v500 = vpop.xlane.xlu0 %499
    %v501 = vsub.f32 %v477, %v486
    %v502 = vsub.f32 %v478, %v488
    %v503 = vsub.f32 %v479, %v490
    %v504 = vsub.f32 %v480, %v492
    %v505 = vsub.f32 %v481, %v494
    %v506 = vsub.f32 %v482, %v496
    %v507 = vsub.f32 %v483, %v498
    %v508 = vsub.f32 %v484, %v500
    %v509 = vmul.f32 %v501, 1.442695
    %v510 = vpow.pop %v509
    %v511 = vmul.f32 %v502, 1.442695
    %v512 = vpow.pop %v511
    %v513 = vmul.f32 %v503, 1.442695
    %v514 = vpow.pop %v513
    %v515 = vmul.f32 %v504, 1.442695
    %v516 = vpow.pop %v515
    %v517 = vmul.f32 %v505, 1.442695
    %v518 = vpow.pop %v517
    %v519 = vmul.f32 %v506, 1.442695
    %v520 = vpow.pop %v519
    %v521 = vmul.f32 %v507, 1.442695
    %v522 = vpow.pop %v521
    %v523 = vmul.f32 %v508, 1.442695
    %v524 = vpow.pop %v523
    %525 = vadd.xlane.f32.xlu0 %v510
    %v526 = vpop.xlane.xlu0 %525
    %527 = vadd.xlane.f32.xlu0 %v512
    %v528 = vpop.xlane.xlu0 %527
    %529 = vadd.xlane.f32.xlu0 %v514
    %v530 = vpop.xlane.xlu0 %529
    %531 = vadd.xlane.f32.xlu0 %v516
    %v532 = vpop.xlane.xlu0 %531
    %533 = vadd.xlane.f32.xlu0 %v518
    %v534 = vpop.xlane.xlu0 %533
    %535 = vadd.xlane.f32.xlu0 %v520
    %v536 = vpop.xlane.xlu0 %535
    %537 = vadd.xlane.f32.xlu0 %v522
    %v538 = vpop.xlane.xlu0 %537
    %539 = vadd.xlane.f32.xlu0 %v524
    %v540 = vpop.xlane.xlu0 %539
    %v541 = vrcp.pop %v526
    %v542 = vrcp.pop %v528
    %v543 = vrcp.pop %v530
    %v544 = vrcp.pop %v532
    %v545 = vrcp.pop %v534
    %v546 = vrcp.pop %v536
    %v547 = vrcp.pop %v538
    %v548 = vrcp.pop %v540
    %v549 = vmul.f32 %v510, %v541
    %v550 = vmul.f32 %v512, %v542
    %v551 = vmul.f32 %v514, %v543
    %v552 = vmul.f32 %v516, %v544
    %v553 = vmul.f32 %v518, %v545
    %v554 = vmul.f32 %v520, %v546
    %v555 = vmul.f32 %v522, %v547
    %v556 = vmul.f32 %v524, %v548
    %v557 = vsel %vm476, %v549, %v436
    %v558 = vsel %vm476, %v550, %v441
    %v559 = vsel %vm476, %v551, %v446
    %v560 = vsel %vm476, %v552, %v451
    %v561 = vsel %vm476, %v553, %v456
    %v562 = vsel %vm476, %v554, %v461
    %v563 = vsel %vm476, %v555, %v466
    %v564 = vsel %vm476, %v556, %v471
    %565 = vst [vmem:[#allocation7] sm:$0xff] %v557
    %566 = vst [vmem:[#allocation7 + $0x8] sm:$0xff] %v558
    %567 = vst [vmem:[#allocation7 + $0x10] sm:$0xff] %v559
    %568 = vst [vmem:[#allocation7 + $0x18] sm:$0xff] %v560
    %569 = vst [vmem:[#allocation7 + $0x20] sm:$0xff] %v561
    %570 = vst [vmem:[#allocation7 + $0x28] sm:$0xff] %v562
    %571 = vst [vmem:[#allocation7 + $0x30] sm:$0xff] %v563
    %572 = vst [vmem:[#allocation7 + $0x38] sm:$0xff] %v564
    // Predicated region
    $region38: #{tpu_custom_call.1} parent=1 // pred_check
      _
    $region39: #{tpu_custom_call.1} parent=1 // pred_check_branch
      %574 = sbr.rel (0) target = $region41
    $region40: #{tpu_custom_call.1} parent=1 // pred_region
      %s576 = ssub.s32 1024, 1024
      %577 = vsyncadd [#allocation4], %s576
      %s578 = sshll.u32 [#allocation7], 4
      %s579 = int_to_ptr.vmem [resolvable:$true] %s578
      %584 = dma.vmem_to_hbm [thread:$0]  %s579, 1024, %s7, [#allocation4], 128, 128, 8
    $region41: #{tpu_custom_call.1} parent=1 // pred_fallthru
      _
    // Predicated region
    $region42: #{tpu_custom_call.1} parent=1 // pred_check
      _
    $region43: #{tpu_custom_call.1} parent=1 // pred_check_branch
      %586 = sbr.rel (0) target = $region45
    $region44: #{tpu_custom_call.1} parent=1 // pred_region
      %587 = dma.done [#allocation4], 1024
    $region45: #{tpu_custom_call.1} parent=1 // pred_fallthru
      _
    %588 = vsyncpa [#allocation3], 1
    %589 = vsyncpa [#allocation6], 1
    %590 = vsyncpa [#allocation4], 1

</llo_original>
